<compile_context>
chip_gen: v7x
topology: tpu7x:2x2x1
jax: 0.10.0
libtpu: 0.0.40
codegen_flags: <defaults>
</compile_context>

<pallas_src>
import jax
import jax.numpy as jnp
from jax.experimental import pallas as pl
from jax.experimental.pallas import tpu as pltpu  # noqa: F401  (kept for TPU backend import)


def _noop_alias_kernel(x_hbm, o_hbm):
    # Output is aliased onto the input (input_output_aliases={0: 0}), so
    # o_hbm already holds x's bytes: there is literally nothing to do.
    # No DMA, no VMEM round-trip, no vector-register traffic.
    pass


def _identity_pallas(x):
    """On-device identity for Thrower's (unreachable) `return x`.

    Per the performance review: operands stay in HBM (pl.ANY), the output
    aliases the input, and the kernel body is a no-op — the call is pure
    launch overhead with zero HBM traffic attributable to the kernel.
    """
    return pl.pallas_call(
        _noop_alias_kernel,
        out_shape=jax.ShapeDtypeStruct(x.shape, x.dtype),
        in_specs=[pl.BlockSpec(memory_space=pl.ANY)],   # stay in HBM
        out_specs=pl.BlockSpec(memory_space=pl.ANY),    # stay in HBM
        input_output_aliases={0: 0},                    # output == input buffer
    )(x)


def thrower_forward(x, *, raise_like_torch: bool = True,
                    force_device_kernel: bool = False):
    """Faithful port of Thrower.forward.

    With raise_like_torch=True (default) this matches PyTorch exactly:
    it raises InterruptedError before any compute.

    With raise_like_torch=False it executes the otherwise-dead identity path.
    The optimized default is to return x directly (no kernel, zero cost).
    force_device_kernel=True runs the aliased no-op Pallas kernel instead,
    purely to exercise the dead-code path on the TPU.
    """
    if raise_like_torch:
        # TODO(synk): raising a host exception has no in-kernel Pallas
        # equivalent; reproduced on the host side (fires at trace time under
        # jax.jit), matching torch semantics.
        raise InterruptedError
    if force_device_kernel:
        return _identity_pallas(x)
    # Review's top optimization: identity is free — no pallas_call, no DMA.
    return x


if __name__ == "__main__":
    key = jax.random.PRNGKey(0)
    x = jax.random.normal(key, (2, 4, 16, 16), dtype=jnp.float32)  # NCHW

    # 1) Exact torch semantics: forward raises InterruptedError.
    raised = False
    try:
        thrower_forward(x)
    except InterruptedError:
        raised = True
    assert raised, "Thrower.forward must raise InterruptedError"

    # 2) Dead-code identity, optimized path: no kernel at all.
    y_fast = thrower_forward(x, raise_like_torch=False)
    assert y_fast is x  # zero-cost identity

    # 3) Exercise the Pallas no-op/aliased kernel once on-device.
    #    Feed it an independent copy because the aliased input buffer may be
    #    donated; don't reuse x_in afterwards.
    x_in = jnp.copy(x)
    y = thrower_forward(x_in, raise_like_torch=False, force_device_kernel=True)
    jax.block_until_ready(y)
    assert y.shape == x.shape and y.dtype == x.dtype
    assert bool(jnp.array_equal(y, x))

    print("KERNEL_OK")
</pallas_src>

<mosaic_0001>
module attributes {stable_mosaic.version = 11 : i64} {
  func.func @_noop_alias_kernel(%arg0: memref<2x4x16x16xf32, #tpu.memory_space<any>>, %arg1: memref<2x4x16x16xf32, #tpu.memory_space<any>>) attributes {dimension_semantics = [], scalar_prefetch = 0 : i64, scratch_operands = 0 : i64, tpu.core_type = #tpu.core_type<tc>} {
    return
  }
}

</mosaic_0001>

<llo_original>
// kernel: tpu_custom_call.1
$region0: #{tpu_custom_call.1}
  #allocation0 [shape = 'u32[]', space=smem, size = 0x4, offset = 0x4, fixed_abs, tag = 'smem constant byte address 0x4 - core index']
  #allocation1 [shape = 'u32[144,128]{1,0:T(1,128)}', space=vmem, size = 0x12000, scoped, tag = 'internal scratch']
  %s0 = inlined_call_operand.hbm [shape: f32[2,4,16,16], index: 0, kind: input, shape index: {}, may-alias: {0,1}]
  %s1 = inlined_call_operand.hbm [shape: f32[2,4,16,16], index: 1, kind: output, shape index: {}, may-alias: {0,1}]
  %s2 = sld [smem:[#allocation0]]
  $region2: #{tpu_custom_call.1} parent=0
    _
  %s4 = ssub.s32 1, %s2
  %s5 = scalar_select 0, %s4, %s2

</llo_original>
